<compile_context>
chip_gen: v7x
topology: tpu7x:2x2x1
jax: 0.10.0
libtpu: 0.0.40
codegen_flags: <defaults>
</compile_context>

<pallas_src>
import jax
import jax.numpy as jnp
from jax import lax
from jax.experimental import pallas as pl
from jax.experimental.pallas import tpu as pltpu

# ---------------------------------------------------------------------------
# Model dimensions (small, synthetic).
# ---------------------------------------------------------------------------
B = 8          # batch
D_IN = 32      # input feature width
HID = 64       # combiner hidden size
NCLS = 16      # category output-feature vocabulary size

HID_PAD = 128  # encoder output lane-padded width (h lives in full 128-lane vregs)
HEAD_W = 128   # fused head width: [W2 (NCLS) | Wb (1) | zero pad]
OUT_W = 128    # lane-dense output slab width

# Weight-slab row layout (single kernel input besides x):
#   rows [0, D_IN)                       W1, lane-padded to HID_PAD
#   rows [D_IN, D_IN + HID_PAD)          fused head weights (rows >= HID are zero)
#   row  D_IN + HID_PAD                  encoder bias b1 (lane-padded)
#   row  D_IN + HID_PAD + 1              fused head bias [b2 | bb | zeros]
_R_W1 = 0
_R_WH = D_IN
_R_B1 = D_IN + HID_PAD
_R_BH = D_IN + HID_PAD + 1
W_ROWS = D_IN + HID_PAD + 2

# Output slab lane layout:
#   [0, NCLS)       category logits
#   [NCLS, 2*NCLS)  category probabilities
#   2*NCLS          category predictions (argmax, stored as f32; exact for < 2**24)
#   2*NCLS + 1      binary logit
#   2*NCLS + 2      binary probability
#   2*NCLS + 3      binary prediction (0.0 / 1.0)
#   rest            zero padding
_L_CPRED = 2 * NCLS
_L_BLOGIT = 2 * NCLS + 1
_L_BPROB = 2 * NCLS + 2
_L_BPRED = 2 * NCLS + 3
_PAD = OUT_W - (2 * NCLS + 4)


# ---------------------------------------------------------------------------
# Fused kernel: encoder matmul + relu, fused category/binary head matmul,
# softmax + argmax, sigmoid + threshold, packed into one lane-dense slab.
# ---------------------------------------------------------------------------
def _inference_kernel(x_ref, w_ref, out_ref):
    x = x_ref[...]                                   # [B, D_IN]
    w1 = w_ref[_R_W1:_R_W1 + D_IN, :]                # [D_IN, HID_PAD]
    wh = w_ref[_R_WH:_R_WH + HID_PAD, :]             # [HID_PAD, HEAD_W]
    b1 = w_ref[_R_B1:_R_B1 + 1, :]                   # [1, HID_PAD]
    bh = w_ref[_R_BH:_R_BH + 1, :]                   # [1, HEAD_W]

    # ---- encoder / combiner: h = relu(x @ W1 + b1), full 128-lane vreg -----
    h = jnp.dot(x, w1, preferred_element_type=jnp.float32)
    h = jnp.maximum(h + b1, 0.0)                     # [B, HID_PAD] (pad lanes = 0)

    # ---- fused output-feature heads: one 128-deep contraction --------------
    head = jnp.dot(h, wh, preferred_element_type=jnp.float32) + bh  # [B, HEAD_W]
    logits = head[:, :NCLS]                          # category logits [B, NCLS]
    blogit = head[:, NCLS:NCLS + 1]                  # binary logit    [B, 1]

    # ---- category prediction module: softmax + argmax ----------------------
    m = jnp.max(logits, axis=-1, keepdims=True)
    e = jnp.exp(logits - m)
    denom = jnp.sum(e, axis=-1, keepdims=True)
    probs = e / denom                                # exact divide (epilogue is cheap)

    is_max = logits == m                             # first occurrence on ties
    iota = lax.broadcasted_iota(jnp.int32, logits.shape, 1)
    idx = jnp.min(jnp.where(is_max, iota, NCLS), axis=-1, keepdims=True)
    idx_f = idx.astype(jnp.float32)

    # ---- binary prediction module: sigmoid + threshold ---------------------
    bprob = 1.0 / (1.0 + jnp.exp(-blogit))           # exact sigmoid
    bpred = (blogit >= 0.0).astype(jnp.float32)      # sigmoid(z) >= 0.5  <=>  z >= 0

    # ---- pack everything into one lane-dense slab, single full store -------
    pad = jnp.zeros((x.shape[0], _PAD), jnp.float32)
    out_ref[...] = jnp.concatenate(
        [logits, probs, idx_f, blogit, bprob, bpred, pad], axis=-1)


@jax.jit
def _run_kernel(x, w_slab):
    # Single invocation, whole arrays resident in VMEM: no grid, no pipeline
    # prologue/epilogue, exactly two input DMAs and one output DMA.
    return pl.pallas_call(
        _inference_kernel,
        out_shape=jax.ShapeDtypeStruct((x.shape[0], OUT_W), jnp.float32),
        in_specs=[
            pl.BlockSpec(memory_space=pltpu.MemorySpace.VMEM),
            pl.BlockSpec(memory_space=pltpu.MemorySpace.VMEM),
        ],
        out_specs=pl.BlockSpec(memory_space=pltpu.MemorySpace.VMEM),
    )(x, w_slab)


# ---------------------------------------------------------------------------
# Python wrapper that mirrors _InferencePredictor.forward: flattened dict out.
# ---------------------------------------------------------------------------
FEATURE_NAME_SUFFIX = "::"


def get_feature_concat_name(feature_name: str, key: str) -> str:
    return feature_name + FEATURE_NAME_SUFFIX + key


class InferencePredictor:
    """JAX/Pallas analogue of ludwig _InferencePredictor with a synthetic model."""

    def __init__(self, key):
        k1, k2, k3, k4, k5, k6 = jax.random.split(key, 6)
        s1 = 1.0 / jnp.sqrt(D_IN)
        s2 = 1.0 / jnp.sqrt(HID)
        self.w1 = jax.random.normal(k1, (D_IN, HID), jnp.float32) * s1
        self.b1 = jax.random.normal(k4, (HID,), jnp.float32) * 0.1
        self.w2 = jax.random.normal(k2, (HID, NCLS), jnp.float32) * s2
        self.b2 = jax.random.normal(k5, (NCLS,), jnp.float32) * 0.1
        self.wb = jax.random.normal(k3, (HID, 1), jnp.float32) * s2
        self.bb = jax.random.normal(k6, (1,), jnp.float32) * 0.1

        # Single fused weight slab: [W1 (lane-padded) ; fused head W ; b1 ; head bias].
        w_slab = jnp.zeros((W_ROWS, HEAD_W), jnp.float32)
        w_slab = w_slab.at[_R_W1:_R_W1 + D_IN, :HID].set(self.w1)
        w_slab = w_slab.at[_R_WH:_R_WH + HID, :NCLS].set(self.w2)
        w_slab = w_slab.at[_R_WH:_R_WH + HID, NCLS].set(self.wb[:, 0])
        w_slab = w_slab.at[_R_B1, :HID].set(self.b1)
        w_slab = w_slab.at[_R_BH, :NCLS].set(self.b2)
        w_slab = w_slab.at[_R_BH, NCLS].set(self.bb[0])
        self.w_slab = w_slab

    def __call__(self, preproc_inputs):
        x = preproc_inputs["number_feature"]
        slab = _run_kernel(x, self.w_slab)

        cat_logits = slab[:, :NCLS]
        cat_probs = slab[:, NCLS:2 * NCLS]
        cat_preds = slab[:, _L_CPRED].astype(jnp.int32)
        bin_logits = slab[:, _L_BLOGIT]
        bin_probs = slab[:, _L_BPROB]
        bin_preds = slab[:, _L_BPRED].astype(jnp.bool_)   # Ludwig returns bool here

        predictions_flattened = {}
        # category output feature prediction module
        for key, val in (("logits", cat_logits),
                         ("probabilities", cat_probs),
                         ("predictions", cat_preds)):
            predictions_flattened[get_feature_concat_name("category_feature", key)] = val
        # binary output feature prediction module
        for key, val in (("logits", bin_logits),
                         ("probabilities", bin_probs),
                         ("predictions", bin_preds)):
            predictions_flattened[get_feature_concat_name("binary_feature", key)] = val
        return predictions_flattened


# ---------------------------------------------------------------------------
# Main
# ---------------------------------------------------------------------------
if __name__ == "__main__":
    key = jax.random.PRNGKey(0)
    k_params, k_data = jax.random.split(key)

    predictor = InferencePredictor(k_params)
    preproc_inputs = {
        "number_feature": jax.random.normal(k_data, (B, D_IN), jnp.float32),
    }

    outputs = predictor(preproc_inputs)
    jax.block_until_ready(outputs)

    # Light sanity checks against a pure-JAX reference of the same synthetic model.
    x = preproc_inputs["number_feature"]
    h_ref = jnp.maximum(x @ predictor.w1 + predictor.b1[None, :], 0.0)
    logits_ref = h_ref @ predictor.w2 + predictor.b2[None, :]
    probs_ref = jax.nn.softmax(logits_ref, axis=-1)
    preds_ref = jnp.argmax(logits_ref, axis=-1).astype(jnp.int32)
    blogit_ref = (h_ref @ predictor.wb)[:, 0] + predictor.bb[0]
    bprob_ref = jax.nn.sigmoid(blogit_ref)
    bpred_ref = blogit_ref >= 0.0

    assert jnp.allclose(outputs["category_feature::logits"], logits_ref, atol=1e-4)
    assert jnp.allclose(outputs["category_feature::probabilities"], probs_ref, atol=1e-4)
    assert jnp.array_equal(outputs["category_feature::predictions"], preds_ref)
    assert jnp.allclose(outputs["binary_feature::logits"], blogit_ref, atol=1e-4)
    assert jnp.allclose(outputs["binary_feature::probabilities"], bprob_ref, atol=1e-4)
    assert jnp.array_equal(outputs["binary_feature::predictions"], bpred_ref)

    print("KERNEL_OK")
</pallas_src>

<mosaic_0001>
module attributes {stable_mosaic.version = 11 : i64} {
  func.func @_inference_kernel(%arg0: memref<8x32xf32, #tpu.memory_space<vmem>>, %arg1: memref<162x128xf32, #tpu.memory_space<vmem>>, %arg2: memref<8x128xf32, #tpu.memory_space<vmem>>) attributes {dimension_semantics = [], scalar_prefetch = 0 : i64, scratch_operands = 0 : i64, tpu.core_type = #tpu.core_type<tc>} {
    %c0 = arith.constant 0 : index
    %c0_0 = arith.constant 0 : index
    %0 = vector.load %arg0[%c0, %c0_0] : memref<8x32xf32, #tpu.memory_space<vmem>>, vector<8x32xf32>
    %c0_1 = arith.constant 0 : index
    %c0_2 = arith.constant 0 : index
    %1 = vector.load %arg1[%c0_1, %c0_2] : memref<162x128xf32, #tpu.memory_space<vmem>>, vector<32x128xf32>
    %c32 = arith.constant 32 : index
    %c0_3 = arith.constant 0 : index
    %2 = vector.load %arg1[%c32, %c0_3] : memref<162x128xf32, #tpu.memory_space<vmem>>, vector<128x128xf32>
    %c160 = arith.constant 160 : index
    %c0_4 = arith.constant 0 : index
    %3 = vector.load %arg1[%c160, %c0_4] : memref<162x128xf32, #tpu.memory_space<vmem>>, vector<1x128xf32>
    %c161 = arith.constant 161 : index
    %c0_5 = arith.constant 0 : index
    %4 = vector.load %arg1[%c161, %c0_5] : memref<162x128xf32, #tpu.memory_space<vmem>>, vector<1x128xf32>
    %cst = arith.constant dense<0.000000e+00> : vector<8x128xf32>
    %5 = tpu.matmul %0, %1, %cst {dimension_numbers = #tpu.dot_dimension_numbers<[1], [0], [0], [1], [0, 0, 1, 1], [], []>} : vector<8x32xf32>, vector<32x128xf32>, vector<8x128xf32> -> vector<8x128xf32>
    %6 = vector.broadcast %3 : vector<1x128xf32> to vector<8x128xf32>
    %7 = arith.addf %5, %6 : vector<8x128xf32>
    %cst_6 = arith.constant 0.000000e+00 : f32
    %8 = vector.broadcast %cst_6 : f32 to vector<8x128xf32>
    %9 = arith.maximumf %7, %8 : vector<8x128xf32>
    %cst_7 = arith.constant dense<0.000000e+00> : vector<8x128xf32>
    %10 = tpu.matmul %9, %2, %cst_7 {dimension_numbers = #tpu.dot_dimension_numbers<[1], [0], [0], [1], [0, 0, 1, 1], [], []>} : vector<8x128xf32>, vector<128x128xf32>, vector<8x128xf32> -> vector<8x128xf32>
    %11 = vector.broadcast %4 : vector<1x128xf32> to vector<8x128xf32>
    %12 = arith.addf %10, %11 : vector<8x128xf32>
    %13 = vector.extract_strided_slice %12 {offsets = [0, 0], sizes = [8, 16], strides = [1, 1]} : vector<8x128xf32> to vector<8x16xf32>
    %14 = vector.extract_strided_slice %12 {offsets = [0, 16], sizes = [8, 1], strides = [1, 1]} : vector<8x128xf32> to vector<8x1xf32>
    %cst_8 = arith.constant dense<0xFF800000> : vector<8xf32>
    %15 = vector.multi_reduction <maximumf>, %13, %cst_8 [1] : vector<8x16xf32> to vector<8xf32>
    %16 = vector.shape_cast %15 : vector<8xf32> to vector<8x1xf32>
    %17 = vector.broadcast %16 : vector<8x1xf32> to vector<8x16xf32>
    %18 = arith.subf %13, %17 : vector<8x16xf32>
    %19 = math.exp %18 : vector<8x16xf32>
    %cst_9 = arith.constant dense<0.000000e+00> : vector<8xf32>
    %20 = vector.multi_reduction <add>, %19, %cst_9 [1] : vector<8x16xf32> to vector<8xf32>
    %21 = vector.shape_cast %20 : vector<8xf32> to vector<8x1xf32>
    %22 = vector.broadcast %21 : vector<8x1xf32> to vector<8x16xf32>
    %23 = arith.divf %19, %22 : vector<8x16xf32>
    %24 = vector.broadcast %16 : vector<8x1xf32> to vector<8x16xf32>
    %25 = arith.cmpf oeq, %13, %24 : vector<8x16xf32>
    %26 = tpu.iota {dimensions = array<i32: 1>} : vector<8x16xi32>
    %c16_i32 = arith.constant 16 : i32
    %27 = vector.broadcast %c16_i32 : i32 to vector<8x16xi32>
    %28 = arith.select %25, %26, %27 : vector<8x16xi1>, vector<8x16xi32>
    %cst_10 = arith.constant dense<2147483647> : vector<8xi32>
    %29 = vector.multi_reduction <minsi>, %28, %cst_10 [1] : vector<8x16xi32> to vector<8xi32>
    %30 = vector.shape_cast %29 : vector<8xi32> to vector<8x1xi32>
    %31 = arith.sitofp %30 : vector<8x1xi32> to vector<8x1xf32>
    %cst_11 = arith.constant 0.000000e+00 : f32
    %32 = vector.broadcast %cst_11 : f32 to vector<8x1xf32>
    %33 = arith.subf %32, %14 : vector<8x1xf32>
    %34 = math.exp %33 : vector<8x1xf32>
    %cst_12 = arith.constant 1.000000e+00 : f32
    %35 = vector.broadcast %cst_12 : f32 to vector<8x1xf32>
    %36 = arith.addf %35, %34 : vector<8x1xf32>
    %cst_13 = arith.constant 1.000000e+00 : f32
    %37 = vector.broadcast %cst_13 : f32 to vector<8x1xf32>
    %38 = arith.divf %37, %36 : vector<8x1xf32>
    %cst_14 = arith.constant 0.000000e+00 : f32
    %39 = vector.broadcast %cst_14 : f32 to vector<8x1xf32>
    %40 = arith.cmpf oge, %14, %39 : vector<8x1xf32>
    %41 = arith.extui %40 : vector<8x1xi1> to vector<8x1xi32>
    %42 = arith.sitofp %41 : vector<8x1xi32> to vector<8x1xf32>
    %cst_15 = arith.constant 0.000000e+00 : f32
    %43 = vector.broadcast %cst_15 : f32 to vector<8x92xf32>
    %44 = tpu.concatenate %13, %23, %31, %14, %38, %42, %43 in 1 : vector<8x16xf32>, vector<8x16xf32>, vector<8x1xf32>, vector<8x1xf32>, vector<8x1xf32>, vector<8x1xf32>, vector<8x92xf32> -> vector<8x128xf32>
    %c0_16 = arith.constant 0 : index
    %c0_17 = arith.constant 0 : index
    %45 = vector.load %arg2[%c0_16, %c0_17] : memref<8x128xf32, #tpu.memory_space<vmem>>, vector<8x128xf32>
    tpu.vector_store %arg2[%c0_16, %c0_17], %44 {strides = array<i32>} : memref<8x128xf32, #tpu.memory_space<vmem>>, vector<8x128xf32>,
    return
  }
}

</mosaic_0001>

<llo_original>
// kernel: _run_kernel.1
$region0: #{_run_kernel.1}
  #allocation0 [shape = 'u32[]', space=smem, size = 0x4, offset = 0x4, fixed_abs, tag = 'smem constant byte address 0x4 - core index']
  #allocation1 [shape = 'u32[144,128]{1,0:T(1,128)}', space=vmem, size = 0x12000, scoped, tag = 'internal scratch']
  %s0 = inlined_call_operand.hbm [shape: f32[8,32], index: 0, kind: input, shape index: {}]
  %s1 = inlined_call_operand.hbm [shape: f32[162,128], index: 1, kind: input, shape index: {}]
  %s2 = inlined_call_operand.hbm [shape: f32[8,128], index: 2, kind: output, shape index: {}]
  %s3 = sld [smem:[#allocation0]]
  $region26: #{_run_kernel.1} parent=0
    _
  %s5 = ssub.s32 1, %s3
  %s6 = scalar_select 0, %s5, %s3
  $region1: #{_run_kernel.1} parent=0
    #allocation2 [shape = 'u8[4096]{0}', space=vmem, size = 0x1000, scoped, tag = 'input window, operand 0, single buffered']
    #allocation3 [shape = 's32[1]{0}', space=sflag, size = 0x4, scoped, tag = 'scoped memory for _run_kernel.1']
    #allocation4 [shape = 's32[1]{0}', space=sflag, size = 0x4, scoped, tag = 'scoped memory for _run_kernel.1']
    #allocation5 [shape = 'u8[86016]{0}', space=vmem, size = 0x15000, scoped, tag = 'input window, operand 1, single buffered']
    #allocation6 [shape = 's32[1]{0}', space=sflag, size = 0x4, scoped, tag = 'scoped memory for _run_kernel.1']
    #allocation7 [shape = 'u8[4096]{0}', space=vmem, size = 0x1000, scoped, tag = 'output window, operand 0, single buffered']
    %7 = vsyncpa [#allocation3], 0
    %8 = vsyncpa [#allocation6], 0
    %9 = vsyncpa [#allocation4], 0
    // Predicated region
    $region2: #{_run_kernel.1} parent=1 // pred_check
      _
    $region3: #{_run_kernel.1} parent=1 // pred_check_branch
      %11 = sbr.rel (0) target = $region5
    $region4: #{_run_kernel.1} parent=1 // pred_region
      %s13 = ssub.s32 128, 128
      %14 = vsyncadd [#allocation3], %s13
      %s16 = sshll.u32 [#allocation2], 4
      %s17 = int_to_ptr.vmem [resolvable:$true] %s16
      %19 = dma.hbm_to_vmem [thread:$0]  %s0, 128, %s17, [#allocation3]
    $region5: #{_run_kernel.1} parent=1 // pred_fallthru
      _
    // Predicated region
    $region6: #{_run_kernel.1} parent=1 // pred_check
      _
    $region7: #{_run_kernel.1} parent=1 // pred_check_branch
      %21 = sbr.rel (0) target = $region9
    $region8: #{_run_kernel.1} parent=1 // pred_region
      %s23 = ssub.s32 2688, 2688
      %24 = vsyncadd [#allocation6], %s23
      %s25 = sshll.u32 [#allocation5], 4
      %s26 = int_to_ptr.vmem [resolvable:$true] %s25
      %31 = dma.hbm_to_vmem [thread:$0]  %s1, 2688, %s26, [#allocation6], 128, 128, 8
    $region9: #{_run_kernel.1} parent=1 // pred_fallthru
      _
    // Predicated region
    $region10: #{_run_kernel.1} parent=1 // pred_check
      _
    $region11: #{_run_kernel.1} parent=1 // pred_check_branch
      %33 = sbr.rel (0) target = $region13
    $region12: #{_run_kernel.1} parent=1 // pred_region
      %34 = dma.done [#allocation3], 128
    $region13: #{_run_kernel.1} parent=1 // pred_fallthru
      _
    // Predicated region
    $region14: #{_run_kernel.1} parent=1 // pred_check
      _
    $region15: #{_run_kernel.1} parent=1 // pred_check_branch
      %36 = sbr.rel (0) target = $region17
    $region16: #{_run_kernel.1} parent=1 // pred_region
      %37 = dma.done [#allocation6], 2688
    $region17: #{_run_kernel.1} parent=1 // pred_fallthru
      _
    %v38 = vld [vmem:[#allocation2] sm:$0xff]
    %v39 = vld [vmem:[#allocation5] sm:$0xff]
    %v40 = vld [vmem:[#allocation5 + $0x8] sm:$0xff]
    %v41 = vld [vmem:[#allocation5 + $0x10] sm:$0xff]
    %v42 = vld [vmem:[#allocation5 + $0x18] sm:$0xff]
    %v43 = vld [vmem:[#allocation5 + $0x20] sm:$0xff]
    %v44 = vld [vmem:[#allocation5 + $0x28] sm:$0xff]
    %v45 = vld [vmem:[#allocation5 + $0x30] sm:$0xff]
    %v46 = vld [vmem:[#allocation5 + $0x38] sm:$0xff]
    %v47 = vld [vmem:[#allocation5 + $0x40] sm:$0xff]
    %v48 = vld [vmem:[#allocation5 + $0x48] sm:$0xff]
    %v49 = vld [vmem:[#allocation5 + $0x50] sm:$0xff]
    %v50 = vld [vmem:[#allocation5 + $0x58] sm:$0xff]
    %v51 = vld [vmem:[#allocation5 + $0x60] sm:$0xff]
    %v52 = vld [vmem:[#allocation5 + $0x68] sm:$0xff]
    %v53 = vld [vmem:[#allocation5 + $0x70] sm:$0xff]
    %v54 = vld [vmem:[#allocation5 + $0x78] sm:$0xff]
    %v55 = vld [vmem:[#allocation5 + $0x80] sm:$0xff]
    %v56 = vld [vmem:[#allocation5 + $0x88] sm:$0xff]
    %v57 = vld [vmem:[#allocation5 + $0x90] sm:$0xff]
    %v58 = vld [vmem:[#allocation5 + $0x98] sm:$0xff]
    %v59 = vld [vmem:[#allocation5 + $0xa0] sm:$0x1]
    %v60 = vld [vmem:[#allocation5 + $0xa1] sm:$0x1]
    %v61 = vlaneseq
    %v62 = vshrl.u32 %v61, 7
    %v63 = vsub.s32 0, %v62
    %v64 = vrot.slane %v59, %v63
    %vm65 = vcmask 261120
    %v67 = vsel %vm65, %v38, 0
    %69 = vmatprep.subr.mxu0 0.0
    %70 = vmatpush1.msra.mxu0 %v39
    %71 = vmatprep.subr.mxu0 0.0
    %72 = vmatpush1.msra.mxu0 %v40
    %73 = vmatprep.subr.mxu0 0.0
    %74 = vmatpush1.msra.mxu0 %v41
    %75 = vmatprep.subr.mxu0 0.0
    %76 = vmatpush1.msra.mxu0 %v42
    %77 = vmatprep.subr.mxu0 0.0
    %78 = vmatpush1.msra.mxu0 0.0
    %79 = vmatprep.subr.mxu0 0.0
    %80 = vmatpush1.msra.mxu0 0.0
    %81 = vmatprep.subr.mxu0 0.0
    %82 = vmatpush1.msra.mxu0 0.0
    %83 = vmatprep.subr.mxu0 0.0
    %84 = vmatpush1.msra.mxu0 0.0
    %85 = vmatprep.subr.mxu0 0.0
    %86 = vmatpush1.msra.mxu0 0.0
    %87 = vmatprep.subr.mxu0 0.0
    %88 = vmatpush1.msra.mxu0 0.0
    %89 = vmatprep.subr.mxu0 0.0
    %90 = vmatpush1.msra.mxu0 0.0
    %91 = vmatprep.subr.mxu0 0.0
    %92 = vmatpush1.msra.mxu0 0.0
    %93 = vmatprep.subr.mxu0 0.0
    %94 = vmatpush1.msra.mxu0 0.0
    %95 = vmatprep.subr.mxu0 0.0
    %96 = vmatpush1.msra.mxu0 0.0
    %97 = vmatprep.subr.mxu0 0.0
    %98 = vmatpush1.msra.mxu0 0.0
    %99 = vmatprep.subr.mxu0 0.0
    %100 = vmatpush1.msra.mxu0 0.0
    %101 = vmatprep.subr.mxu0 0.0
    %102 = vmatpush1.msra.mxu0 0.0
    %103 = vmatprep.subr.mxu0 0.0
    %104 = vmatpush1.msra.mxu0 0.0
    %105 = vmatprep.subr.mxu0 0.0
    %106 = vmatpush1.msra.mxu0 0.0
    %107 = vmatprep.subr.mxu0 0.0
    %108 = vmatpush1.msra.mxu0 0.0
    %109 = vmatprep.subr.mxu0 0.0
    %110 = vmatpush1.msra.mxu0 0.0
    %111 = vmatprep.subr.mxu0 0.0
    %112 = vmatpush1.msra.mxu0 0.0
    %113 = vmatprep.subr.mxu0 0.0
    %114 = vmatpush1.msra.mxu0 0.0
    %115 = vmatprep.subr.mxu0 0.0
    %116 = vmatpush1.msra.mxu0 0.0
    %117 = vmatprep.subr.mxu0 0.0
    %118 = vmatpush1.msra.mxu0 0.0
    %119 = vmatprep.subr.mxu0 0.0
    %120 = vmatpush1.msra.mxu0 0.0
    %121 = vmatprep.subr.mxu0 0.0
    %122 = vmatpush1.msra.mxu0 0.0
    %123 = vmatprep.subr.mxu0 0.0
    %124 = vmatpush1.msra.mxu0 0.0
    %125 = vmatprep.subr.mxu0 0.0
    %126 = vmatpush1.msra.mxu0 0.0
    %127 = vmatprep.subr.mxu0 0.0
    %128 = vmatpush1.msra.mxu0 0.0
    %129 = vmatprep.subr.mxu0 0.0
    %130 = vmatpush1.msra.mxu0 0.0
    %131 = vmatprep.subr.mxu0 0.0
    %132 = vmatpush1.msra.mxu0 0.0
    %133 = vmatprep.mubr.f32.mxu0 0.0
    %134 = vmatmul.mubr.f32.gmra.mrb[0].mxu0 %v67
    %v135 = vpop.f32.mrb[0].mxu0
    %v136 = vadd.f32 %v64, %v135
    %v137 = vpop.f32.mrb[0].mxu0
    %138 = vdwg.mxu0
    %v139 = vmax.f32 %v136, 0.0
    %v140 = vlaneseq
    %v141 = vshrl.u32 %v140, 7
    %v142 = vsub.s32 0, %v141
    %v143 = vrot.slane %v60, %v142
    %144 = vmatprep.subr.mxu0 0.0
    %145 = vmatpush1.msra.mxu0 %v43
    %146 = vmatprep.subr.mxu0 0.0
    %147 = vmatpush1.msra.mxu0 %v44
    %148 = vmatprep.subr.mxu0 0.0
    %149 = vmatpush1.msra.mxu0 %v45
    %150 = vmatprep.subr.mxu0 0.0
    %151 = vmatpush1.msra.mxu0 %v46
    %152 = vmatprep.subr.mxu0 0.0
    %153 = vmatpush1.msra.mxu0 %v47
    %154 = vmatprep.subr.mxu0 0.0
    %155 = vmatpush1.msra.mxu0 %v48
    %156 = vmatprep.subr.mxu0 0.0
    %157 = vmatpush1.msra.mxu0 %v49
    %158 = vmatprep.subr.mxu0 0.0
    %159 = vmatpush1.msra.mxu0 %v50
    %160 = vmatprep.subr.mxu0 0.0
    %161 = vmatpush1.msra.mxu0 %v51
    %162 = vmatprep.subr.mxu0 0.0
    %163 = vmatpush1.msra.mxu0 %v52
    %164 = vmatprep.subr.mxu0 0.0
    %165 = vmatpush1.msra.mxu0 %v53
    %166 = vmatprep.subr.mxu0 0.0
    %167 = vmatpush1.msra.mxu0 %v54
    %168 = vmatprep.subr.mxu0 0.0
    %169 = vmatpush1.msra.mxu0 %v55
    %170 = vmatprep.subr.mxu0 0.0
    %171 = vmatpush1.msra.mxu0 %v56
    %172 = vmatprep.subr.mxu0 0.0
    %173 = vmatpush1.msra.mxu0 %v57
    %174 = vmatprep.subr.mxu0 0.0
    %175 = vmatpush1.msra.mxu0 %v58
    %176 = vmatprep.subr.mxu0 0.0
    %177 = vmatpush1.msra.mxu0 0.0
    %178 = vmatprep.subr.mxu0 0.0
    %179 = vmatpush1.msra.mxu0 0.0
    %180 = vmatprep.subr.mxu0 0.0
    %181 = vmatpush1.msra.mxu0 0.0
    %182 = vmatprep.subr.mxu0 0.0
    %183 = vmatpush1.msra.mxu0 0.0
    %184 = vmatprep.subr.mxu0 0.0
    %185 = vmatpush1.msra.mxu0 0.0
    %186 = vmatprep.subr.mxu0 0.0
    %187 = vmatpush1.msra.mxu0 0.0
    %188 = vmatprep.subr.mxu0 0.0
    %189 = vmatpush1.msra.mxu0 0.0
    %190 = vmatprep.subr.mxu0 0.0
    %191 = vmatpush1.msra.mxu0 0.0
    %192 = vmatprep.subr.mxu0 0.0
    %193 = vmatpush1.msra.mxu0 0.0
    %194 = vmatprep.subr.mxu0 0.0
    %195 = vmatpush1.msra.mxu0 0.0
    %196 = vmatprep.subr.mxu0 0.0
    %197 = vmatpush1.msra.mxu0 0.0
    %198 = vmatprep.subr.mxu0 0.0
    %199 = vmatpush1.msra.mxu0 0.0
    %200 = vmatprep.subr.mxu0 0.0
    %201 = vmatpush1.msra.mxu0 0.0
    %202 = vmatprep.subr.mxu0 0.0
    %203 = vmatpush1.msra.mxu0 0.0
    %204 = vmatprep.subr.mxu0 0.0
    %205 = vmatpush1.msra.mxu0 0.0
    %206 = vmatprep.subr.mxu0 0.0
    %207 = vmatpush1.msra.mxu0 0.0
    %208 = vmatprep.mubr.f32.mxu0 0.0
    %209 = vmatmul.mubr.f32.gmra.mrb[0].mxu0 %v139
    %v210 = vpop.f32.mrb[0].mxu0
    %v211 = vadd.f32 %v143, %v210
    %v212 = vpop.f32.mrb[0].mxu0
    %213 = vdwg.mxu0
    %vm214 = vcmask 130048
    %v215 = vsel %vm214, %v211, -inf
    %216 = vmax.xlane.f32.xlu0 %v215
    %v217 = vpop.xlane.xlu0 %216
    %v218 = vsub.f32 %v211, %v217
    %v219 = vmul.f32 %v218, 1.442695
    %v220 = vpow.pop %v219
    %v221 = vsel %vm214, %v220, 0.0
    %222 = vadd.xlane.f32.xlu0 %v221
    %v223 = vpop.xlane.xlu0 %222
    %v224 = vrcp.pop %v223
    %v225 = vmul.f32 %v220, %v224
    %vm226 = vcmp.eq.f32.partialorder %v211, %v217
    %v227 = vlaneseq
    %v228 = vand.u32 %v227, 127
    %v229 = vsel %vm226, %v228, 16
    %v230 = vsel %vm214, %v229, 2147483647
    %v231 = vand.u32 %v230, 65535
    %v232 = vshra.s32 %v230, 16
    %v233 = vcvt.s32.f32 %v231
    %v234 = vcvt.s32.f32 %v232
    %235 = vmin.xlane.f32.xlu0 %v234
    %v236 = vpop.xlane.xlu0 %235
    %vm237 = vcmp.eq.f32.partialorder %v234, %v236
    %v238 = vsel %vm237, %v233, inf
    %239 = vmin.xlane.f32.xlu0 %v238
    %v240 = vpop.xlane.xlu0 %239
    %v241 = vcvt.f32.s32 %v240
    %v242 = vcvt.f32.s32 %v236
    %v243 = vshll.u32 %v242, 16
    %v244 = vadd.s32 %v243, %v241
    %v245 = vcvt.s32.f32 %v244
    %v246 = vsub.f32 0.0, %v211
    %v247 = vmul.f32 %v246, 1.442695
    %v248 = vpow.pop %v247
    %v249 = vadd.f32 %v248, 1.0
    %v250 = vrcp.pop %v249
    %v251 = vmul.f32 1.0, %v250
    %vm252 = vcmp.ge.f32.partialorder %v211, 0.0
    %v253 = vsel %vm252, 1, 0
    %v254 = vcvt.s32.f32 %v253
    %256 = vrot.lane.b32.xlu0 %v225, 16
    %v257 = vpop.permute.xlu0 %256
    %260 = vrot.lane.b32.xlu0 %v211, 17
    %v261 = vpop.permute.xlu0 %260
    %264 = vrot.lane.b32.xlu0 %v251, 18
    %v265 = vpop.permute.xlu0 %264
    %268 = vrot.lane.b32.xlu0 %v254, 19
    %v269 = vpop.permute.xlu0 %268
    %v271 = vsel %vm214, %v211, %v257
    %v272 = vsel %vm65, %v271, %v245
    %vm273 = vcmask 269312
    %v274 = vsel %vm273, %v272, %v261
    %vm275 = vcmask 277504
    %v276 = vsel %vm275, %v274, %v265
    %vm277 = vcmask 285696
    %v278 = vsel %vm277, %v276, %v269
    %vm279 = vcmask 293888
    %v280 = vsel %vm279, %v278, 0.0
    %281 = vst [vmem:[#allocation7] sm:$0xff] %v280
    // Predicated region
    $region18: #{_run_kernel.1} parent=1 // pred_check
      _
    $region19: #{_run_kernel.1} parent=1 // pred_check_branch
      %283 = sbr.rel (0) target = $region21
    $region20: #{_run_kernel.1} parent=1 // pred_region
      %s285 = ssub.s32 128, 128
      %286 = vsyncadd [#allocation4], %s285
      %s288 = sshll.u32 [#allocation7], 4
      %s289 = int_to_ptr.vmem [resolvable:$true] %s288
      %291 = dma.vmem_to_hbm [thread:$0]  %s289, 128, %s2, [#allocation4]
    $region21: #{_run_kernel.1} parent=1 // pred_fallthru
      _
    // Predicated region
    $region22: #{_run_kernel.1} parent=1 // pred_check
      _
    $region23: #{_run_kernel.1} parent=1 // pred_check_branch
      %293 = sbr.rel (0) target = $region25
    $region24: #{_run_kernel.1} parent=1 // pred_region
      %294 = dma.done [#allocation4], 128
    $region25: #{_run_kernel.1} parent=1 // pred_fallthru
      _
    %295 = vsyncpa [#allocation3], 1
    %296 = vsyncpa [#allocation6], 1
    %297 = vsyncpa [#allocation4], 1

</llo_original>
